<compile_context>
chip_gen: v6e
topology: v6e:2x2x1
jax: 0.10.0
libtpu: 0.0.40
codegen_flags: <defaults>
</compile_context>

<pallas_src>
import functools

import jax
import jax.numpy as jnp
from jax import lax
from jax.experimental import pallas as pl
from jax.experimental.pallas import tpu as pltpu


# ----------------------------------------------------------------------------
# Fused Pallas kernel
# ----------------------------------------------------------------------------
def adain_kernel(x_ref, p_ref, wt_ref, o_ref, *, cout, w_scale, eps, conv_dtype):
    """Fused AdaIN forward for a single batch element (N == 1).

    x_ref:  (Cout, H*W)     content features, channel-major (lane-dense H*W)
    p_ref:  (Kpad, H*W)     style im2col patches (+ ones row, zero-padded K), lane-dense
    wt_ref: (2*Cout, Kpad)  [to_ysi; to_ybi] raw weights (+ bias column / w_scale)
    o_ref:  (Cout, H*W)
    """
    # ---- merged to_ysi / to_ybi conv: ONE canonical (M,K)@(K,N) MXU matmul ----
    # Equalized-LR scale folded into the tiny weight tile in-kernel; the bias rides
    # along as the last K column against the ones row of the patch matrix.
    wt = (wt_ref[...].astype(jnp.float32) * w_scale).astype(conv_dtype)
    conv = jnp.dot(wt, p_ref[...],
                   preferred_element_type=jnp.float32)        # (2*Cout, H*W), lane-dense
    ysi = conv[:cout]                                          # (Cout, H*W)
    ybi = conv[cout:]                                          # (Cout, H*W)

    # ---- AdaIN normalization (stats in f32) -----------------------------------
    xv = x_ref[...].astype(jnp.float32)                        # (Cout, H*W)
    mean_c = jnp.mean(xv, axis=0, keepdims=True)               # torch.mean(x, dim=1), N==1
    n = xv.size
    s1 = jnp.sum(xv)                                           # fused single pass over x:
    s2 = jnp.sum(xv * xv)                                      #   sum and sum-of-squares
    gmean = s1 / n
    var = (s2 - s1 * gmean) / (n - 1)                          # torch.std(x): unbiased
    inv_std = lax.rsqrt(var + eps)                             # EUP rsqrt; eps=0 -> exact torch

    o_ref[...] = (ysi * ((xv - mean_c) * inv_std) + ybi).astype(o_ref.dtype)


# ----------------------------------------------------------------------------
# Wrapper (PyTorch-style NCHW in / NCHW out)
# ----------------------------------------------------------------------------
def adain_forward(x_nchw, y_nchw, params, *, eps=0.0, conv_dtype=jnp.float32):
    N, C, H, W = x_nchw.shape
    Ny, Cin, Hy, Wy = y_nchw.shape
    assert N == 1 and Ny == 1, "torch.mean(x, dim=1) broadcast requires N == 1"
    assert (Hy, Wy) == (H, W)
    cout = C
    HW = H * W
    w_scale = (2.0 / (Cin * 9)) ** 0.5          # equalized-LR scale (static Python float)

    # x: NCHW -> (C, H*W): free reshape; channel-major & lane-dense in-kernel.
    x2 = x_nchw.reshape(C, HW)

    # Style patches built wrapper-side, directly in the transposed lane-dense (K, H*W)
    # orientation the MXU consumes (no in-kernel im2col / lane shuffles / transpose).
    # patches[ci*9 + dy*3 + dx, h*W + w] = ypad[ci, h+dy, w+dx]
    # TODO(synk): at real sizes replace with in-kernel 9-tap accumulation + halo fetch.
    ypad = jnp.pad(y_nchw, ((0, 0), (0, 0), (1, 1), (1, 1)))          # (1, Cin, H+2, W+2)
    taps = [ypad[:, :, dy:dy + H, dx:dx + W]                          # 9 x (1, Cin, H, W)
            for dy in range(3) for dx in range(3)]
    patches = jnp.stack(taps, axis=2).reshape(Cin * 9, HW)            # (9*Cin, H*W)

    # Fold conv bias into the matmul: ones row on the patches, bias column on the weights
    # (pre-divided by w_scale so the in-kernel scale restores it).  Zero-pad K to a
    # multiple of 8 to keep the operand sublane-aligned.
    K = Cin * 9 + 1
    Kpad = ((K + 7) // 8) * 8
    patches = jnp.concatenate([patches, jnp.ones((1, HW), patches.dtype)], axis=0)
    patches = jnp.pad(patches, ((0, Kpad - K), (0, 0))).astype(conv_dtype)  # (Kpad, H*W)

    # Merge to_ysi / to_ybi weights: (2*Cout, Cin, 3, 3) -> (2*Cout, 9*Cin); row ordering
    # (ci, ky, kx) matches the patch rows above.
    w = jnp.concatenate([params["ysi_w"], params["ybi_w"]], axis=0).reshape(2 * cout, Cin * 9)
    b = jnp.concatenate([params["ysi_b"], params["ybi_b"]], axis=0).reshape(2 * cout, 1)
    wt = jnp.concatenate([w, b / w_scale], axis=1)                    # (2*Cout, K)
    wt = jnp.pad(wt, ((0, 0), (0, Kpad - K)))                         # (2*Cout, Kpad)

    kern = functools.partial(adain_kernel, cout=cout, w_scale=w_scale,
                             eps=eps, conv_dtype=conv_dtype)
    out2 = pl.pallas_call(
        kern,
        out_shape=jax.ShapeDtypeStruct((C, HW), x_nchw.dtype),
        grid=(1,),
        in_specs=[
            pl.BlockSpec((C, HW), lambda i: (0, 0)),
            pl.BlockSpec((Kpad, HW), lambda i: (0, 0)),
            pl.BlockSpec((2 * cout, Kpad), lambda i: (0, 0)),
        ],
        out_specs=pl.BlockSpec((C, HW), lambda i: (0, 0)),
        # TODO(synk): when tiled for real shapes, add a 'parallel' HW axis (v7x 2 TCs)
        #             and set vmem_limit_bytes per generation.
        compiler_params=pltpu.CompilerParams(
            dimension_semantics=("arbitrary",)),
    )(x2, patches, wt)

    return out2.reshape(N, C, H, W)


# ----------------------------------------------------------------------------
# Pure-JAX reference (independent path for a self-check)
# ----------------------------------------------------------------------------
def adain_reference(x, y, params):
    Cin = y.shape[1]
    scale = (2.0 / (Cin * 9)) ** 0.5

    def conv(w, b):
        o = lax.conv_general_dilated(y, w * scale, (1, 1), 'SAME',
                                     dimension_numbers=('NCHW', 'OIHW', 'NCHW'))
        return o + b.reshape(1, -1, 1, 1)

    ysi = conv(params["ysi_w"], params["ysi_b"])
    ybi = conv(params["ybi_w"], params["ybi_b"])
    mean = jnp.mean(x, axis=1)                      # (N, H, W), broadcasts for N == 1
    std = jnp.sqrt(jnp.var(x, ddof=1))              # global unbiased std (torch.std)
    return ysi * ((x - mean) / std) + ybi


if __name__ == "__main__":
    # N=1 required by the mean(dim=1) broadcast; AdaIN's default 512 channels shrunk
    # for this synthetic test.  H*W = 256 keeps the compute layout lane-dense.
    N, C_OUT, C_IN, H, W = 1, 8, 8, 16, 16

    key = jax.random.PRNGKey(0)
    kx, ky, k1, k2 = jax.random.split(key, 4)
    x = jax.random.normal(kx, (N, C_OUT, H, W), jnp.float32)     # content (NCHW)
    y = jax.random.normal(ky, (N, C_IN, H, W), jnp.float32)      # style   (NCHW)
    params = {
        "ysi_w": jax.random.normal(k1, (C_OUT, C_IN, 3, 3), jnp.float32),
        "ysi_b": jnp.zeros((C_OUT,), jnp.float32),
        "ybi_w": jax.random.normal(k2, (C_OUT, C_IN, 3, 3), jnp.float32),
        "ybi_b": jnp.zeros((C_OUT,), jnp.float32),
    }

    ref = adain_reference(x, y, params)

    # f32 MXU path: exact PyTorch semantics.
    out = jax.block_until_ready(jax.jit(adain_forward)(x, y, params))
    assert out.shape == (N, C_OUT, H, W), out.shape
    assert bool(jnp.all(jnp.isfinite(out)))
    assert bool(jnp.allclose(out, ref, rtol=1e-3, atol=1e-3)), \
        float(jnp.max(jnp.abs(out - ref)))

    # bf16 MXU operand path (review item: ~3x MXU throughput at real sizes on v5e/v6e/v7x);
    # f32 accumulation + f32 stats, checked at loose tolerance.
    out_bf16 = jax.block_until_ready(
        jax.jit(functools.partial(adain_forward, conv_dtype=jnp.bfloat16))(x, y, params))
    assert bool(jnp.all(jnp.isfinite(out_bf16)))
    assert bool(jnp.allclose(out_bf16, ref, rtol=1e-1, atol=1e-1)), \
        float(jnp.max(jnp.abs(out_bf16 - ref)))

    print("KERNEL_OK")
</pallas_src>

<mosaic_0001>
module attributes {stable_mosaic.version = 11 : i64} {
  func.func @adain_kernel(%arg0: i32, %arg1: memref<8x256xf32, #tpu.memory_space<vmem>>, %arg2: memref<80x256xf32, #tpu.memory_space<vmem>>, %arg3: memref<16x80xf32, #tpu.memory_space<vmem>>, %arg4: memref<8x256xf32, #tpu.memory_space<vmem>>) attributes {dimension_semantics = [#tpu.dimension_semantics<arbitrary>], iteration_bounds = array<i64: 1>, scalar_prefetch = 0 : i64, scratch_operands = 0 : i64, tpu.core_type = #tpu.core_type<tc>, window_params = [{pipeline_mode = #tpu.pipeline_mode<synchronous>, transform_indices = @transform_0, window_bounds = array<i64: 8, 256>}, {pipeline_mode = #tpu.pipeline_mode<synchronous>, transform_indices = @transform_1, window_bounds = array<i64: 80, 256>}, {pipeline_mode = #tpu.pipeline_mode<synchronous>, transform_indices = @transform_2, window_bounds = array<i64: 16, 80>}, {pipeline_mode = #tpu.pipeline_mode<synchronous>, transform_indices = @transform_3, window_bounds = array<i64: 8, 256>}]} {
    %c0 = arith.constant 0 : index
    %c0_0 = arith.constant 0 : index
    %0 = vector.load %arg3[%c0, %c0_0] : memref<16x80xf32, #tpu.memory_space<vmem>>, vector<16x80xf32>
    %cst = arith.constant 0.166666672 : f32
    %1 = vector.broadcast %cst : f32 to vector<16x80xf32>
    %2 = arith.mulf %0, %1 : vector<16x80xf32>
    %c0_1 = arith.constant 0 : index
    %c0_2 = arith.constant 0 : index
    %3 = vector.load %arg2[%c0_1, %c0_2] : memref<80x256xf32, #tpu.memory_space<vmem>>, vector<80x256xf32>
    %cst_3 = arith.constant dense<0.000000e+00> : vector<16x256xf32>
    %4 = tpu.matmul %2, %3, %cst_3 {dimension_numbers = #tpu.dot_dimension_numbers<[1], [0], [0], [1], [0, 0, 1, 1], [], []>} : vector<16x80xf32>, vector<80x256xf32>, vector<16x256xf32> -> vector<16x256xf32>
    %5 = vector.extract_strided_slice %4 {offsets = [0, 0], sizes = [8, 256], strides = [1, 1]} : vector<16x256xf32> to vector<8x256xf32>
    %6 = vector.extract_strided_slice %4 {offsets = [8, 0], sizes = [8, 256], strides = [1, 1]} : vector<16x256xf32> to vector<8x256xf32>
    %c0_4 = arith.constant 0 : index
    %c0_5 = arith.constant 0 : index
    %7 = vector.load %arg1[%c0_4, %c0_5] : memref<8x256xf32, #tpu.memory_space<vmem>>, vector<8x256xf32>
    %cst_6 = arith.constant dense<0.000000e+00> : vector<256xf32>
    %8 = vector.multi_reduction <add>, %7, %cst_6 [0] : vector<8x256xf32> to vector<256xf32>
    %9 = vector.shape_cast %8 : vector<256xf32> to vector<1x256xf32>
    %cst_7 = arith.constant 8.000000e+00 : f32
    %10 = vector.broadcast %cst_7 : f32 to vector<1x256xf32>
    %11 = arith.divf %9, %10 : vector<1x256xf32>
    %12 = vector.shape_cast %7 : vector<8x256xf32> to vector<1x8x256xf32>
    %cst_8 = arith.constant dense<0.000000e+00> : vector<1xf32>
    %13 = vector.multi_reduction <add>, %12, %cst_8 [1, 2] : vector<1x8x256xf32> to vector<1xf32>
    %14 = vector.shape_cast %13 : vector<1xf32> to vector<1x1x1xf32>
    %15 = vector.extract %14[0, 0, 0] : f32 from vector<1x1x1xf32>
    %16 = arith.mulf %7, %7 : vector<8x256xf32>
    %17 = vector.shape_cast %16 : vector<8x256xf32> to vector<1x8x256xf32>
    %cst_9 = arith.constant dense<0.000000e+00> : vector<1xf32>
    %18 = vector.multi_reduction <add>, %17, %cst_9 [1, 2] : vector<1x8x256xf32> to vector<1xf32>
    %19 = vector.shape_cast %18 : vector<1xf32> to vector<1x1x1xf32>
    %20 = vector.extract %19[0, 0, 0] : f32 from vector<1x1x1xf32>
    %cst_10 = arith.constant 2.048000e+03 : f32
    %21 = arith.divf %15, %cst_10 : f32
    %22 = arith.mulf %15, %21 : f32
    %23 = arith.subf %20, %22 : f32
    %cst_11 = arith.constant 2.047000e+03 : f32
    %24 = arith.divf %23, %cst_11 : f32
    %cst_12 = arith.constant 0.000000e+00 : f32
    %25 = arith.addf %24, %cst_12 : f32
    %26 = math.rsqrt %25 : f32
    %27 = vector.broadcast %11 : vector<1x256xf32> to vector<8x256xf32>
    %28 = arith.subf %7, %27 : vector<8x256xf32>
    %29 = vector.broadcast %26 : f32 to vector<8x256xf32>
    %30 = arith.mulf %28, %29 : vector<8x256xf32>
    %31 = arith.mulf %5, %30 : vector<8x256xf32>
    %32 = arith.addf %31, %6 : vector<8x256xf32>
    %c0_13 = arith.constant 0 : index
    %c0_14 = arith.constant 0 : index
    %33 = vector.load %arg4[%c0_13, %c0_14] : memref<8x256xf32, #tpu.memory_space<vmem>>, vector<8x256xf32>
    tpu.vector_store %arg4[%c0_13, %c0_14], %32 {strides = array<i32>} : memref<8x256xf32, #tpu.memory_space<vmem>>, vector<8x256xf32>,
    return
  }
  func.func @transform_0(%arg0: i32) -> (i32, i32) {
    %c0_i32 = arith.constant 0 : i32
    %c0_i32_0 = arith.constant 0 : i32
    %c0_i32_1 = arith.constant 0 : i32
    return %c0_i32, %c0_i32_0 : i32, i32
  }
  func.func @transform_1(%arg0: i32) -> (i32, i32) {
    %c0_i32 = arith.constant 0 : i32
    %c0_i32_0 = arith.constant 0 : i32
    %c0_i32_1 = arith.constant 0 : i32
    return %c0_i32, %c0_i32_0 : i32, i32
  }
  func.func @transform_2(%arg0: i32) -> (i32, i32) {
    %c0_i32 = arith.constant 0 : i32
    %c0_i32_0 = arith.constant 0 : i32
    %c0_i32_1 = arith.constant 0 : i32
    return %c0_i32, %c0_i32_0 : i32, i32
  }
  func.func @transform_3(%arg0: i32) -> (i32, i32) {
    %c0_i32 = arith.constant 0 : i32
    %c0_i32_0 = arith.constant 0 : i32
    %c0_i32_1 = arith.constant 0 : i32
    return %c0_i32, %c0_i32_0 : i32, i32
  }
}

</mosaic_0001>

<llo_original>
// kernel: adain_forward.1
$region0: #{adain_forward.1}
  #allocation0 [shape = 'u32[]', space=smem, size = 0x4, offset = 0x4, fixed_abs, tag = 'smem constant byte address 0x4 - core index']
  #allocation1 [shape = 'u32[144,128]{1,0:T(1,128)}', space=vmem, size = 0x12000, scoped, tag = 'internal scratch']
  %s0 = inlined_call_operand.vmem [shape: f32[8,256], index: 0, kind: input, shape index: {}]
  %s1 = inlined_call_operand.vmem [shape: f32[80,256], index: 1, kind: input, shape index: {}]
  %s2 = inlined_call_operand.vmem [shape: f32[16,80], index: 2, kind: input, shape index: {}]
  %s3 = inlined_call_operand.vmem [shape: f32[8,256], index: 3, kind: output, shape index: {}]
  %s4 = sld [smem:[#allocation0]]
  $region22: #{adain_forward.1} parent=0
    _
  %s6 = ssub.s32 1, %s4
  %s7 = scalar_select 0, %s6, %s4
  // Predicated region
  $region2: #{adain_forward.1} parent=0 // pred_check
    _
  $region3: #{adain_forward.1} parent=0 // pred_check_branch
    %9 = sbr.rel (0) target = $region5
  $region4: #{adain_forward.1} parent=0 // pred_region
    _
  $region5: #{adain_forward.1} parent=0 // pred_fallthru
    _
  // Predicated region
  $region6: #{adain_forward.1} parent=0 // pred_check
    _
  $region7: #{adain_forward.1} parent=0 // pred_check_branch
    %11 = sbr.rel (0) target = $region9
  $region8: #{adain_forward.1} parent=0 // pred_region
    _
  $region9: #{adain_forward.1} parent=0 // pred_fallthru
    _
  // Predicated region
  $region10: #{adain_forward.1} parent=0 // pred_check
    _
  $region11: #{adain_forward.1} parent=0 // pred_check_branch
    %13 = sbr.rel (0) target = $region13
  $region12: #{adain_forward.1} parent=0 // pred_region
    _
  $region13: #{adain_forward.1} parent=0 // pred_fallthru
    _
  %v14 = vld [vmem:[%s2] sm:$0xff]
  %v15 = vld [vmem:[%s2 + $0x8] sm:$0xff]
  %v16 = vmul.f32 %v14, 0.16666667
  %v17 = vmul.f32 %v15, 0.16666667
  %v18 = vld [vmem:[%s1] sm:$0xff]
  %v19 = vld [vmem:[%s1 + $0x8] sm:$0xff]
  %v20 = vld [vmem:[%s1 + $0x10] sm:$0xff]
  %v21 = vld [vmem:[%s1 + $0x18] sm:$0xff]
  %v22 = vld [vmem:[%s1 + $0x20] sm:$0xff]
  %v23 = vld [vmem:[%s1 + $0x28] sm:$0xff]
  %v24 = vld [vmem:[%s1 + $0x30] sm:$0xff]
  %v25 = vld [vmem:[%s1 + $0x38] sm:$0xff]
  %v26 = vld [vmem:[%s1 + $0x40] sm:$0xff]
  %v27 = vld [vmem:[%s1 + $0x48] sm:$0xff]
  %v28 = vld [vmem:[%s1 + $0x50] sm:$0xff]
  %v29 = vld [vmem:[%s1 + $0x58] sm:$0xff]
  %v30 = vld [vmem:[%s1 + $0x60] sm:$0xff]
  %v31 = vld [vmem:[%s1 + $0x68] sm:$0xff]
  %v32 = vld [vmem:[%s1 + $0x70] sm:$0xff]
  %v33 = vld [vmem:[%s1 + $0x78] sm:$0xff]
  %v34 = vld [vmem:[%s1 + $0x80] sm:$0xff]
  %v35 = vld [vmem:[%s1 + $0x88] sm:$0xff]
  %v36 = vld [vmem:[%s1 + $0x90] sm:$0xff]
  %v37 = vld [vmem:[%s1 + $0x98] sm:$0xff]
  %vm38 = vcmask 654336
  %v40 = vsel %vm38, %v16, 0
  %v43 = vsel %vm38, %v17, 0
  %45 = vmatprep.subr.mxu0 0.0
  %46 = vmatpush1.msra.mxu0 0.0
  %47 = vmatprep.subr.mxu0 0.0
  %48 = vmatpush1.msra.mxu0 0.0
  %49 = vmatprep.subr.mxu0 0.0
  %50 = vmatpush1.msra.mxu0 0.0
  %51 = vmatprep.subr.mxu0 0.0
  %52 = vmatpush1.msra.mxu0 0.0
  %53 = vmatprep.subr.mxu0 0.0
  %54 = vmatpush1.msra.mxu0 0.0
  %55 = vmatprep.subr.mxu0 0.0
  %56 = vmatpush1.msra.mxu0 0.0
  %57 = vmatprep.subr.mxu0 %v37
  %58 = vmatpush1.msra.mxu0 %v36
  %59 = vmatprep.subr.mxu0 %v35
  %60 = vmatpush1.msra.mxu0 %v34
  %61 = vmatprep.subr.mxu0 %v33
  %62 = vmatpush1.msra.mxu0 %v32
  %63 = vmatprep.subr.mxu0 %v31
  %64 = vmatpush1.msra.mxu0 %v30
  %65 = vmatprep.subr.mxu0 %v29
  %66 = vmatpush1.msra.mxu0 %v28
  %67 = vmatprep.subr.mxu0 %v27
  %68 = vmatpush1.msra.mxu0 %v26
  %69 = vmatprep.subr.mxu0 %v25
  %70 = vmatpush1.msra.mxu0 %v24
  %71 = vmatprep.subr.mxu0 %v23
  %72 = vmatpush1.msra.mxu0 %v22
  %73 = vmatprep.subr.mxu0 %v21
  %74 = vmatpush1.msra.mxu0 %v20
  %75 = vmatprep.subr.mxu0 %v19
  %76 = vmatpush1.msra.mxu0 %v18
  %77 = vmatprep.subr.mxu0 0.0
  %78 = vmatpush2.msra.mxu0 0.0
  %79 = vmatprep.subr.mxu0 0.0
  %80 = vmatpush2.msra.mxu0 0.0
  %81 = vmatprep.subr.mxu0 0.0
  %82 = vmatpush2.msra.mxu0 0.0
  %83 = vmatprep.subr.mxu0 0.0
  %84 = vmatpush2.msra.mxu0 0.0
  %85 = vmatprep.subr.mxu0 0.0
  %86 = vmatpush2.msra.mxu0 0.0
  %87 = vmatprep.subr.mxu0 0.0
  %88 = vmatpush2.msra.mxu0 0.0
  %89 = vmatprep.subr.mxu0 0.0
  %90 = vmatpush2.msra.mxu0 0.0
  %91 = vmatprep.subr.mxu0 0.0
  %92 = vmatpush2.msra.mxu0 0.0
  %93 = vmatprep.subr.mxu0 0.0
  %94 = vmatpush2.msra.mxu0 0.0
  %95 = vmatprep.subr.mxu0 0.0
  %96 = vmatpush2.msra.mxu0 0.0
  %97 = vmatprep.subr.mxu0 0.0
  %98 = vmatpush2.msra.mxu0 0.0
  %99 = vmatprep.subr.mxu0 0.0
  %100 = vmatpush2.msra.mxu0 0.0
  %101 = vmatprep.subr.mxu0 0.0
  %102 = vmatpush2.msra.mxu0 0.0
  %103 = vmatprep.subr.mxu0 0.0
  %104 = vmatpush2.msra.mxu0 0.0
  %105 = vmatprep.subr.mxu0 0.0
  %106 = vmatpush2.msra.mxu0 0.0
  %107 = vmatprep.subr.mxu0 0.0
  %108 = vmatpush2.msra.mxu0 0.0
  %109 = vmatprep.mubr.f32.mxu0 0.0
  %110 = vmatmul.mubr.f32.gmra.mxu0 %v40
  %v111 = vpop.f32.mrf.mxu0
  %v112 = vadd.f32 0.0, %v111
  %v113 = vpop.f32.mrf.mxu0
  %v114 = vadd.f32 0.0, %v113
  %115 = vmatprep.mubr.f32.mxu0 0.0
  %116 = vmatmul.mubr.f32.gmra.mxu0 %v43
  %v117 = vpop.f32.mrf.mxu0
  %v118 = vadd.f32 0.0, %v117
  %v119 = vpop.f32.mrf.mxu0
  %v120 = vadd.f32 0.0, %v119
  %121 = vdwg.mxu0
  %v122 = vld [vmem:[%s0] sm:$0xff]
  %v123 = vld [vmem:[%s0 + $0x8] sm:$0xff]
  %v124 = vrot.slane %v122, 4
  %v125 = vadd.f32 %v122, %v124
  %v126 = vrot.slane %v125, 2
  %v127 = vadd.f32 %v125, %v126
  %v128 = vrot.slane %v127, 1
  %v129 = vadd.f32 %v127, %v128
  %v130 = vrot.slane %v123, 4
  %v131 = vadd.f32 %v123, %v130
  %v132 = vrot.slane %v131, 2
  %v133 = vadd.f32 %v131, %v132
  %v134 = vrot.slane %v133, 1
  %v135 = vadd.f32 %v133, %v134
  %v136 = vrcp.pop 8.0
  %v137 = vmul.f32 %v129, %v136
  %v138 = vmul.f32 %v135, %v136
  %v139 = vadd.f32 %v122, %v123
  %140 = vadd.xlane.f32.xlu0 %v139
  %v141 = vpop.xlane.xlu0 %140
  %v142 = vrot.slane %v141, 4
  %v143 = vadd.f32 %v141, %v142
  %v144 = vrot.slane %v143, 2
  %v145 = vadd.f32 %v143, %v144
  %v146 = vrot.slane %v145, 1
  %v147 = vadd.f32 %v145, %v146
  %s148 = vtos %v147
  %v149 = vmul.f32 %v122, %v122
  %v150 = vmul.f32 %v123, %v123
  %v151 = vadd.f32 %v149, %v150
  %152 = vadd.xlane.f32.xlu0 %v151
  %v153 = vpop.xlane.xlu0 %152
  %v154 = vrot.slane %v153, 4
  %v155 = vadd.f32 %v153, %v154
  %v156 = vrot.slane %v155, 2
  %v157 = vadd.f32 %v155, %v156
  %v158 = vrot.slane %v157, 1
  %v159 = vadd.f32 %v157, %v158
  %s160 = vtos %v159
  %v161 = vrcp.pop 2048.0
  %s162 = vtos %v161
  %s163 = smul.f32 %s148, %s162
  %s164 = smul.f32 %s148, %s163
  %s165 = ssub.f32 %s160, %s164
  %v166 = vrcp.pop 2047.0
  %s167 = vtos %v166
  %s168 = smul.f32 %s165, %s167
  %s169 = sadd.f32 %s168, 0.0
  %v170 = vstv %s169
  %v171 = vrsqrt.pop %v170
  %s172 = vtos %v171
  %v173 = vsub.f32 %v122, %v137
  %v174 = vsub.f32 %v123, %v138
  %v175 = vstv %s172
  %v176 = vmul.f32 %v173, %v175
  %v177 = vmul.f32 %v174, %v175
  %v178 = vmul.f32 %v112, %v176
  %v179 = vmul.f32 %v114, %v177
  %v180 = vadd.f32 %v178, %v118
  %v181 = vadd.f32 %v179, %v120
  %182 = vst [vmem:[%s3] sm:$0xff] %v180
  %183 = vst [vmem:[%s3 + $0x8] sm:$0xff] %v181
  // Predicated region
  $region14: #{adain_forward.1} parent=0 // pred_check
    _
  $region15: #{adain_forward.1} parent=0 // pred_check_branch
    %185 = sbr.rel (0) target = $region17
  $region16: #{adain_forward.1} parent=0 // pred_region
    _
  $region17: #{adain_forward.1} parent=0 // pred_fallthru
    _
  // Predicated region
  $region18: #{adain_forward.1} parent=0 // pred_check
    _
  $region19: #{adain_forward.1} parent=0 // pred_check_branch
    %187 = sbr.rel (0) target = $region21
  $region20: #{adain_forward.1} parent=0 // pred_region
    _
  $region21: #{adain_forward.1} parent=0 // pred_fallthru
    _

</llo_original>
